<compile_context>
chip_gen: v5e
topology: v5e:2x2
jax: 0.10.0
libtpu: 0.0.40
codegen_flags: <defaults>
</compile_context>

<pallas_src>
import functools

import jax
import jax.numpy as jnp
from jax.experimental import pallas as pl
from jax.experimental.pallas import tpu as pltpu


def _round_up(x, m):
    return ((x + m - 1) // m) * m


def _cdiv(a, b):
    return (a + b - 1) // b


# ------------------------------- kernel -------------------------------------

def _vae_kernel(x_ref, eps_ref, w1_ref, w_ref, b_ref, out_ref, *, len_z, P, fused_head):
    """One batch tile of the full VAE forward pass.

    w1_ref : (n, P)        first recognition layer (natural row count, no slicing)
    w_ref  : (P, nblk*P)   remaining weight blocks, 128-lane aligned columns
    b_ref  : (8, P)        bias slab (f32)
    """
    f32 = jnp.float32
    cdt = w_ref.dtype            # MXU operand dtype: bf16 (default) or f32

    x = x_ref[...]               # (TB, n)   input dtype
    eps = eps_ref[...]           # (TB, P)   f32, eps placed on its designated lanes
    b = b_ref[...]               # (8, P)    f32

    def mm(h, blk):
        # h @ (P-wide weight block #blk); bf16 operands, f32 accumulation on the MXU.
        return jnp.dot(h.astype(cdt), w_ref[:, blk * P:(blk + 1) * P],
                       preferred_element_type=f32)

    # ---- recognition model q_phi(z|x) ----
    h1 = jnp.tanh(jnp.dot(x.astype(cdt), w1_ref[...], preferred_element_type=f32) + b[0, :])
    h2 = jnp.tanh(mm(h1, 0) + b[1, :])

    if fused_head:
        # Single 128-lane head: lanes [0,len_z)=mu, [len_z,2*len_z)=logvar, rest 0.
        ml = mm(h2, 1) + b[2, :]
        lane = jax.lax.broadcasted_iota(jnp.int32, ml.shape, 1)
        # u: lanes [0,len_z)=mu, [len_z,2*len_z)=eps*exp(0.5*logvar), rest exactly 0
        #    (eps is host-placed on lanes [len_z,2*len_z) and zero elsewhere).
        u = jnp.where(lane < len_z, ml, eps * jnp.exp(0.5 * ml))
        # Wg1 rows duplicated in the slab -> u @ Wg1_dup == (mu + eps*std) @ Wg1 == z @ Wg1.
        g1 = jnp.tanh(mm(u, 2) + b[3, :])
        g2 = jnp.tanh(mm(g1, 3) + b[4, :])
        out = jnp.tanh(mm(g2, 4) + b[5, :])
    else:
        # General fallback (2*len_z > P): separate mu / logvar blocks (2 MXU passes).
        mu = mm(h2, 1) + b[2, :]
        logvar = mm(h2, 2) + b[3, :]
        z = eps * jnp.exp(0.5 * logvar) + mu        # padded lanes stay exactly 0
        g1 = jnp.tanh(mm(z, 3) + b[4, :])
        g2 = jnp.tanh(mm(g1, 4) + b[5, :])
        out = jnp.tanh(mm(g2, 5) + b[6, :])

    out_ref[...] = out.astype(out_ref.dtype)


# ------------------------------ packing -------------------------------------

def _pack_params(params, *, n, r1, r2, len_z, P, fused_head, wdt):
    """Pack all weights/biases into slabs with 128-lane-aligned zero padding."""

    def wpad(a, rows):
        out = jnp.zeros((rows, P), wdt)
        return out.at[:a.shape[0], :a.shape[1]].set(a.astype(wdt))

    def bpad(v):
        out = jnp.zeros((P,), jnp.float32)
        return out.at[:v.shape[0]].set(v.astype(jnp.float32))

    zrow = jnp.zeros((P,), jnp.float32)
    w1 = wpad(params["w1"], n)                                   # (n, P)

    if fused_head:
        head = jnp.zeros((P, P), wdt)
        head = head.at[:r2, :len_z].set(params["wm"].astype(wdt))
        head = head.at[:r2, len_z:2 * len_z].set(params["wls"].astype(wdt))
        wg1d = jnp.zeros((P, P), wdt)
        wg1d = wg1d.at[:len_z, :r2].set(params["wg1"].astype(wdt))
        wg1d = wg1d.at[len_z:2 * len_z, :r2].set(params["wg1"].astype(wdt))
        w_slab = jnp.concatenate(
            [wpad(params["w2"], P), head, wg1d,
             wpad(params["wg2"], P), wpad(params["wg3"], P)], axis=1)        # (P, 5P)

        head_b = jnp.zeros((P,), jnp.float32)
        head_b = head_b.at[:len_z].set(params["bm"].astype(jnp.float32))
        head_b = head_b.at[len_z:2 * len_z].set(params["bls"].astype(jnp.float32))
        b_slab = jnp.stack(
            [bpad(params["b1"]), bpad(params["b2"]), head_b,
             bpad(params["bg1"]), bpad(params["bg2"]), bpad(params["bg3"]),
             zrow, zrow], axis=0)                                            # (8, P)
    else:
        w_slab = jnp.concatenate(
            [wpad(params["w2"], P), wpad(params["wm"], P), wpad(params["wls"], P),
             wpad(params["wg1"], P), wpad(params["wg2"], P), wpad(params["wg3"], P)],
            axis=1)                                                          # (P, 6P)
        b_slab = jnp.stack(
            [bpad(params["b1"]), bpad(params["b2"]), bpad(params["bm"]),
             bpad(params["bls"]), bpad(params["bg1"]), bpad(params["bg2"]),
             bpad(params["bg3"]), zrow], axis=0)                             # (8, P)

    return w1, w_slab, b_slab


# ------------------------------ wrapper -------------------------------------

@functools.partial(jax.jit, static_argnames=("use_bf16",))
def vae_forward(x, eps, params, use_bf16=True):
    """x: (B, input_dim); eps: (B, len_z); params: dict of (in,out) weights / (out,) biases."""
    B, n = x.shape
    len_z = eps.shape[1]
    r1 = params["w1"].shape[1]
    r2 = params["w2"].shape[1]

    P = _round_up(max(n, r1, r2, len_z), 128)      # common padded feature width
    fused_head = (2 * len_z) <= P
    wdt = jnp.bfloat16 if use_bf16 else jnp.float32

    # ---- batch tiling: no host padding / round-up; ragged tail handled by Pallas ----
    if B <= 256:
        TB = B                                     # single exact block
    else:
        # >= 2 grid steps (v7x megacore), <= 1024 rows per tile.
        TB = min(_round_up(_cdiv(B, 2), 8), 1024)
    grid = (_cdiv(B, TB),)

    # ---- eps placed on the lanes the kernel expects (tiny array) ----
    col0 = len_z if fused_head else 0
    eps_pad = jnp.zeros((B, P), jnp.float32).at[:, col0:col0 + len_z].set(
        eps.astype(jnp.float32))

    w1, w_slab, b_slab = _pack_params(
        params, n=n, r1=r1, r2=r2, len_z=len_z, P=P, fused_head=fused_head, wdt=wdt)
    nblk = w_slab.shape[1] // P

    # Advisory cost hint for XLA's scheduler.
    flops = 2 * B * P * (n + nblk * P)
    transcendentals = B * 6 * P                     # 5 tanh + 1 exp per row (128 lanes)
    bytes_accessed = (B * n * x.dtype.itemsize + B * P * 4 + B * P * x.dtype.itemsize
                      + w1.size * w1.dtype.itemsize + w_slab.size * w_slab.dtype.itemsize
                      + b_slab.size * 4)

    kernel = functools.partial(_vae_kernel, len_z=len_z, P=P, fused_head=fused_head)

    out_p = pl.pallas_call(
        kernel,
        out_shape=jax.ShapeDtypeStruct((B, P), x.dtype),
        grid=grid,
        in_specs=[
            pl.BlockSpec((TB, n), lambda i: (i, 0)),          # x tile (natural width)
            pl.BlockSpec((TB, P), lambda i: (i, 0)),          # eps tile
            pl.BlockSpec((n, P), lambda i: (0, 0)),           # W1 (VMEM-resident)
            pl.BlockSpec((P, nblk * P), lambda i: (0, 0)),    # weight slab (VMEM-resident)
            pl.BlockSpec((8, P), lambda i: (0, 0)),           # bias slab (VMEM-resident)
        ],
        out_specs=pl.BlockSpec((TB, P), lambda i: (i, 0)),    # lane-dense 128-wide output
        compiler_params=pltpu.CompilerParams(dimension_semantics=("parallel",)),
        cost_estimate=pl.CostEstimate(
            flops=flops, transcendentals=transcendentals, bytes_accessed=bytes_accessed),
    )(x, eps_pad, w1, w_slab, b_slab)

    return out_p[:, :n]


# ----------------------------- init + reference -----------------------------

def xavier_normal(key, fan_in, fan_out, dtype=jnp.float32):
    # Matches torch.nn.init.xavier_normal_: std = sqrt(2 / (fan_in + fan_out)).
    std = (2.0 / (fan_in + fan_out)) ** 0.5
    # Stored as (fan_in, fan_out) for row-major x @ W (== x @ W_pt.T).
    return std * jax.random.normal(key, (fan_in, fan_out), dtype=dtype)


def init_params(key, input_dim, recog_1, recog_2, len_z):
    ks = jax.random.split(key, 7)
    p = {}
    p["w1"] = xavier_normal(ks[0], input_dim, recog_1)
    p["b1"] = jnp.zeros((recog_1,), jnp.float32)
    p["w2"] = xavier_normal(ks[1], recog_1, recog_2)
    p["b2"] = jnp.zeros((recog_2,), jnp.float32)
    p["wm"] = xavier_normal(ks[2], recog_2, len_z)
    p["bm"] = jnp.zeros((len_z,), jnp.float32)
    p["wls"] = xavier_normal(ks[3], recog_2, len_z)
    p["bls"] = jnp.zeros((len_z,), jnp.float32)
    p["wg1"] = xavier_normal(ks[4], len_z, recog_2)
    p["bg1"] = jnp.zeros((recog_2,), jnp.float32)
    p["wg2"] = xavier_normal(ks[5], recog_2, recog_1)
    p["bg2"] = jnp.zeros((recog_1,), jnp.float32)
    p["wg3"] = xavier_normal(ks[6], recog_1, input_dim)
    p["bg3"] = jnp.zeros((input_dim,), jnp.float32)
    return p


def vae_forward_ref(x, eps, p):
    """Pure-JAX f32 reference for correctness checking."""
    h1 = jnp.tanh(x @ p["w1"] + p["b1"])
    h2 = jnp.tanh(h1 @ p["w2"] + p["b2"])
    mu = h2 @ p["wm"] + p["bm"]
    logvar = h2 @ p["wls"] + p["bls"]
    z = eps * jnp.exp(0.5 * logvar) + mu
    g1 = jnp.tanh(z @ p["wg1"] + p["bg1"])
    g2 = jnp.tanh(g1 @ p["wg2"] + p["bg2"])
    return jnp.tanh(g2 @ p["wg3"] + p["bg3"])


if __name__ == "__main__":
    config = {"input_dim": 64, "recog_1": 48, "recog_2": 32, "len_z": 16}

    key = jax.random.PRNGKey(0)
    k_param, k_x1, k_e1, k_x2, k_e2 = jax.random.split(key, 5)

    params = init_params(k_param, config["input_dim"], config["recog_1"],
                         config["recog_2"], config["len_z"])

    # --- check 1: small batch, f32 MXU operands (tight structural check) ---
    b1 = 8
    x1 = jax.random.normal(k_x1, (b1, config["input_dim"]), jnp.float32)
    e1 = jax.random.normal(k_e1, (b1, config["len_z"]), jnp.float32)
    out1 = jax.block_until_ready(vae_forward(x1, e1, params, use_bf16=False))
    ref1 = vae_forward_ref(x1, e1, params)
    assert out1.shape == (b1, config["input_dim"])
    assert jnp.allclose(out1, ref1, atol=5e-3, rtol=0.0), "f32 kernel mismatch vs reference"

    # --- check 2: ragged multi-tile batch on the bf16 production path ---
    b2 = 300   # -> TB=152, grid=(2,), ragged last tile handled by masked writes
    x2 = jax.random.normal(k_x2, (b2, config["input_dim"]), jnp.float32)
    e2 = jax.random.normal(k_e2, (b2, config["len_z"]), jnp.float32)
    out2 = jax.block_until_ready(vae_forward(x2, e2, params, use_bf16=True))
    ref2 = vae_forward_ref(x2, e2, params)
    assert out2.shape == (b2, config["input_dim"])
    assert jnp.allclose(out2, ref2, atol=5e-2, rtol=0.0), "bf16 kernel mismatch vs reference"

    print("KERNEL_OK")
</pallas_src>

<mosaic_0001>
module attributes {stable_mosaic.version = 11 : i64} {
  func.func @_vae_kernel(%arg0: i32, %arg1: memref<8x64xf32, #tpu.memory_space<vmem>>, %arg2: memref<8x128xf32, #tpu.memory_space<vmem>>, %arg3: memref<64x128xf32, #tpu.memory_space<vmem>>, %arg4: memref<128x640xf32, #tpu.memory_space<vmem>>, %arg5: memref<8x128xf32, #tpu.memory_space<vmem>>, %arg6: memref<8x128xf32, #tpu.memory_space<vmem>>) attributes {dimension_semantics = [#tpu.dimension_semantics<parallel>], iteration_bounds = array<i64: 1>, scalar_prefetch = 0 : i64, scratch_operands = 0 : i64, tpu.core_type = #tpu.core_type<tc>, window_params = [{transform_indices = @transform_0, window_bounds = array<i64: 8, 64>}, {transform_indices = @transform_1, window_bounds = array<i64: 8, 128>}, {pipeline_mode = #tpu.pipeline_mode<synchronous>, transform_indices = @transform_2, window_bounds = array<i64: 64, 128>}, {pipeline_mode = #tpu.pipeline_mode<synchronous>, transform_indices = @transform_3, window_bounds = array<i64: 128, 640>}, {pipeline_mode = #tpu.pipeline_mode<synchronous>, transform_indices = @transform_4, window_bounds = array<i64: 8, 128>}, {transform_indices = @transform_5, window_bounds = array<i64: 8, 128>}]} {
    %c0 = arith.constant 0 : index
    %c0_0 = arith.constant 0 : index
    %0 = vector.load %arg1[%c0, %c0_0] : memref<8x64xf32, #tpu.memory_space<vmem>>, vector<8x64xf32>
    %c0_1 = arith.constant 0 : index
    %c0_2 = arith.constant 0 : index
    %1 = vector.load %arg2[%c0_1, %c0_2] : memref<8x128xf32, #tpu.memory_space<vmem>>, vector<8x128xf32>
    %c0_3 = arith.constant 0 : index
    %c0_4 = arith.constant 0 : index
    %2 = vector.load %arg5[%c0_3, %c0_4] : memref<8x128xf32, #tpu.memory_space<vmem>>, vector<8x128xf32>
    %c0_5 = arith.constant 0 : index
    %c0_6 = arith.constant 0 : index
    %3 = vector.load %arg3[%c0_5, %c0_6] : memref<64x128xf32, #tpu.memory_space<vmem>>, vector<64x128xf32>
    %cst = arith.constant dense<0.000000e+00> : vector<8x128xf32>
    %4 = tpu.matmul %0, %3, %cst {dimension_numbers = #tpu.dot_dimension_numbers<[1], [0], [0], [1], [0, 0, 1, 1], [], []>} : vector<8x64xf32>, vector<64x128xf32>, vector<8x128xf32> -> vector<8x128xf32>
    %5 = vector.extract_strided_slice %2 {offsets = [0, 0], sizes = [1, 128], strides = [1, 1]} : vector<8x128xf32> to vector<1x128xf32>
    %6 = vector.shape_cast %5 : vector<1x128xf32> to vector<128xf32>
    %7 = vector.shape_cast %6 : vector<128xf32> to vector<1x128xf32>
    %8 = vector.broadcast %7 : vector<1x128xf32> to vector<8x128xf32>
    %9 = arith.addf %4, %8 : vector<8x128xf32>
    %10 = math.tanh %9 : vector<8x128xf32>
    %c0_7 = arith.constant 0 : index
    %c0_8 = arith.constant 0 : index
    %11 = vector.load %arg4[%c0_7, %c0_8] : memref<128x640xf32, #tpu.memory_space<vmem>>, vector<128x128xf32>
    %cst_9 = arith.constant dense<0.000000e+00> : vector<8x128xf32>
    %12 = tpu.matmul %10, %11, %cst_9 {dimension_numbers = #tpu.dot_dimension_numbers<[1], [0], [0], [1], [0, 0, 1, 1], [], []>} : vector<8x128xf32>, vector<128x128xf32>, vector<8x128xf32> -> vector<8x128xf32>
    %13 = vector.extract_strided_slice %2 {offsets = [1, 0], sizes = [1, 128], strides = [1, 1]} : vector<8x128xf32> to vector<1x128xf32>
    %14 = vector.shape_cast %13 : vector<1x128xf32> to vector<128xf32>
    %15 = vector.shape_cast %14 : vector<128xf32> to vector<1x128xf32>
    %16 = vector.broadcast %15 : vector<1x128xf32> to vector<8x128xf32>
    %17 = arith.addf %12, %16 : vector<8x128xf32>
    %18 = math.tanh %17 : vector<8x128xf32>
    %c0_10 = arith.constant 0 : index
    %c128 = arith.constant 128 : index
    %19 = vector.load %arg4[%c0_10, %c128] : memref<128x640xf32, #tpu.memory_space<vmem>>, vector<128x128xf32>
    %cst_11 = arith.constant dense<0.000000e+00> : vector<8x128xf32>
    %20 = tpu.matmul %18, %19, %cst_11 {dimension_numbers = #tpu.dot_dimension_numbers<[1], [0], [0], [1], [0, 0, 1, 1], [], []>} : vector<8x128xf32>, vector<128x128xf32>, vector<8x128xf32> -> vector<8x128xf32>
    %21 = vector.extract_strided_slice %2 {offsets = [2, 0], sizes = [1, 128], strides = [1, 1]} : vector<8x128xf32> to vector<1x128xf32>
    %22 = vector.shape_cast %21 : vector<1x128xf32> to vector<128xf32>
    %23 = vector.shape_cast %22 : vector<128xf32> to vector<1x128xf32>
    %24 = vector.broadcast %23 : vector<1x128xf32> to vector<8x128xf32>
    %25 = arith.addf %20, %24 : vector<8x128xf32>
    %26 = tpu.iota {dimensions = array<i32: 1>} : vector<8x128xi32>
    %c16_i32 = arith.constant 16 : i32
    %27 = vector.broadcast %c16_i32 : i32 to vector<8x128xi32>
    %28 = arith.cmpi slt, %26, %27 : vector<8x128xi32>
    %cst_12 = arith.constant 5.000000e-01 : f32
    %29 = vector.broadcast %cst_12 : f32 to vector<8x128xf32>
    %30 = arith.mulf %29, %25 : vector<8x128xf32>
    %31 = math.exp %30 : vector<8x128xf32>
    %32 = arith.mulf %1, %31 : vector<8x128xf32>
    %33 = arith.select %28, %25, %32 : vector<8x128xi1>, vector<8x128xf32>
    %c0_13 = arith.constant 0 : index
    %c256 = arith.constant 256 : index
    %34 = vector.load %arg4[%c0_13, %c256] : memref<128x640xf32, #tpu.memory_space<vmem>>, vector<128x128xf32>
    %cst_14 = arith.constant dense<0.000000e+00> : vector<8x128xf32>
    %35 = tpu.matmul %33, %34, %cst_14 {dimension_numbers = #tpu.dot_dimension_numbers<[1], [0], [0], [1], [0, 0, 1, 1], [], []>} : vector<8x128xf32>, vector<128x128xf32>, vector<8x128xf32> -> vector<8x128xf32>
    %36 = vector.extract_strided_slice %2 {offsets = [3, 0], sizes = [1, 128], strides = [1, 1]} : vector<8x128xf32> to vector<1x128xf32>
    %37 = vector.shape_cast %36 : vector<1x128xf32> to vector<128xf32>
    %38 = vector.shape_cast %37 : vector<128xf32> to vector<1x128xf32>
    %39 = vector.broadcast %38 : vector<1x128xf32> to vector<8x128xf32>
    %40 = arith.addf %35, %39 : vector<8x128xf32>
    %41 = math.tanh %40 : vector<8x128xf32>
    %c0_15 = arith.constant 0 : index
    %c384 = arith.constant 384 : index
    %42 = vector.load %arg4[%c0_15, %c384] : memref<128x640xf32, #tpu.memory_space<vmem>>, vector<128x128xf32>
    %cst_16 = arith.constant dense<0.000000e+00> : vector<8x128xf32>
    %43 = tpu.matmul %41, %42, %cst_16 {dimension_numbers = #tpu.dot_dimension_numbers<[1], [0], [0], [1], [0, 0, 1, 1], [], []>} : vector<8x128xf32>, vector<128x128xf32>, vector<8x128xf32> -> vector<8x128xf32>
    %44 = vector.extract_strided_slice %2 {offsets = [4, 0], sizes = [1, 128], strides = [1, 1]} : vector<8x128xf32> to vector<1x128xf32>
    %45 = vector.shape_cast %44 : vector<1x128xf32> to vector<128xf32>
    %46 = vector.shape_cast %45 : vector<128xf32> to vector<1x128xf32>
    %47 = vector.broadcast %46 : vector<1x128xf32> to vector<8x128xf32>
    %48 = arith.addf %43, %47 : vector<8x128xf32>
    %49 = math.tanh %48 : vector<8x128xf32>
    %c0_17 = arith.constant 0 : index
    %c512 = arith.constant 512 : index
    %50 = vector.load %arg4[%c0_17, %c512] : memref<128x640xf32, #tpu.memory_space<vmem>>, vector<128x128xf32>
    %cst_18 = arith.constant dense<0.000000e+00> : vector<8x128xf32>
    %51 = tpu.matmul %49, %50, %cst_18 {dimension_numbers = #tpu.dot_dimension_numbers<[1], [0], [0], [1], [0, 0, 1, 1], [], []>} : vector<8x128xf32>, vector<128x128xf32>, vector<8x128xf32> -> vector<8x128xf32>
    %52 = vector.extract_strided_slice %2 {offsets = [5, 0], sizes = [1, 128], strides = [1, 1]} : vector<8x128xf32> to vector<1x128xf32>
    %53 = vector.shape_cast %52 : vector<1x128xf32> to vector<128xf32>
    %54 = vector.shape_cast %53 : vector<128xf32> to vector<1x128xf32>
    %55 = vector.broadcast %54 : vector<1x128xf32> to vector<8x128xf32>
    %56 = arith.addf %51, %55 : vector<8x128xf32>
    %57 = math.tanh %56 : vector<8x128xf32>
    %c0_19 = arith.constant 0 : index
    %c0_20 = arith.constant 0 : index
    %58 = vector.load %arg6[%c0_19, %c0_20] : memref<8x128xf32, #tpu.memory_space<vmem>>, vector<8x128xf32>
    tpu.vector_store %arg6[%c0_19, %c0_20], %57 {strides = array<i32>} : memref<8x128xf32, #tpu.memory_space<vmem>>, vector<8x128xf32>,
    return
  }
  func.func @transform_0(%arg0: i32) -> (i32, i32) {
    %c0_i32 = arith.constant 0 : i32
    %c0_i32_0 = arith.constant 0 : i32
    return %arg0, %c0_i32 : i32, i32
  }
  func.func @transform_1(%arg0: i32) -> (i32, i32) {
    %c0_i32 = arith.constant 0 : i32
    %c0_i32_0 = arith.constant 0 : i32
    return %arg0, %c0_i32 : i32, i32
  }
  func.func @transform_2(%arg0: i32) -> (i32, i32) {
    %c0_i32 = arith.constant 0 : i32
    %c0_i32_0 = arith.constant 0 : i32
    %c0_i32_1 = arith.constant 0 : i32
    return %c0_i32, %c0_i32_0 : i32, i32
  }
  func.func @transform_3(%arg0: i32) -> (i32, i32) {
    %c0_i32 = arith.constant 0 : i32
    %c0_i32_0 = arith.constant 0 : i32
    %c0_i32_1 = arith.constant 0 : i32
    return %c0_i32, %c0_i32_0 : i32, i32
  }
  func.func @transform_4(%arg0: i32) -> (i32, i32) {
    %c0_i32 = arith.constant 0 : i32
    %c0_i32_0 = arith.constant 0 : i32
    %c0_i32_1 = arith.constant 0 : i32
    return %c0_i32, %c0_i32_0 : i32, i32
  }
  func.func @transform_5(%arg0: i32) -> (i32, i32) {
    %c0_i32 = arith.constant 0 : i32
    %c0_i32_0 = arith.constant 0 : i32
    return %arg0, %c0_i32 : i32, i32
  }
}

</mosaic_0001>

<llo_original>
// kernel: vae_forward.1
$region0: #{vae_forward.1}
  #allocation0 [shape = 'u32[]', space=smem, size = 0x4, offset = 0x4, fixed_abs, tag = 'smem constant byte address 0x4 - core index']
  #allocation1 [shape = 'u32[72,128]{1,0:T(1,128)}', space=vmem, size = 0x9000, scoped, tag = 'internal scratch']
  %s0 = inlined_call_operand.vmem [shape: f32[8,64], index: 0, kind: input, shape index: {}]
  %s1 = inlined_call_operand.vmem [shape: f32[8,128], index: 1, kind: input, shape index: {}]
  %s2 = inlined_call_operand.vmem [shape: f32[64,128], index: 2, kind: input, shape index: {}]
  %s3 = inlined_call_operand.vmem [shape: f32[128,640], index: 3, kind: input, shape index: {}]
  %s4 = inlined_call_operand.vmem [shape: f32[8,128], index: 4, kind: input, shape index: {}]
  %s5 = inlined_call_operand.hbm [shape: f32[8,128], index: 5, kind: output, shape index: {}]
  %s6 = sld [smem:[#allocation0]]
  $region30: #{vae_forward.1} parent=0
    _
  %s8 = ssub.s32 1, %s6
  %s9 = scalar_select 0, %s8, %s6
  $region1: #{vae_forward.1} parent=0
    #allocation2 [shape = 'u8[4096]{0}', space=vmem, size = 0x1000, scoped, tag = 'output window, operand 0, single buffered']
    #allocation3 [shape = 's32[1]{0}', space=sflag, size = 0x4, scoped, tag = 'scoped memory for vae_forward.1']
    %10 = vsyncpa [#allocation3], 0
    // Predicated region
    $region2: #{vae_forward.1} parent=1 // pred_check
      _
    $region3: #{vae_forward.1} parent=1 // pred_check_branch
      %12 = sbr.rel (0) target = $region5
    $region4: #{vae_forward.1} parent=1 // pred_region
      _
    $region5: #{vae_forward.1} parent=1 // pred_fallthru
      _
    // Predicated region
    $region6: #{vae_forward.1} parent=1 // pred_check
      _
    $region7: #{vae_forward.1} parent=1 // pred_check_branch
      %14 = sbr.rel (0) target = $region9
    $region8: #{vae_forward.1} parent=1 // pred_region
      _
    $region9: #{vae_forward.1} parent=1 // pred_fallthru
      _
    // Predicated region
    $region10: #{vae_forward.1} parent=1 // pred_check
      _
    $region11: #{vae_forward.1} parent=1 // pred_check_branch
      %16 = sbr.rel (0) target = $region13
    $region12: #{vae_forward.1} parent=1 // pred_region
      _
    $region13: #{vae_forward.1} parent=1 // pred_fallthru
      _
    // Predicated region
    $region14: #{vae_forward.1} parent=1 // pred_check
      _
    $region15: #{vae_forward.1} parent=1 // pred_check_branch
      %18 = sbr.rel (0) target = $region17
    $region16: #{vae_forward.1} parent=1 // pred_region
      _
    $region17: #{vae_forward.1} parent=1 // pred_fallthru
      _
    // Predicated region
    $region18: #{vae_forward.1} parent=1 // pred_check
      _
    $region19: #{vae_forward.1} parent=1 // pred_check_branch
      %20 = sbr.rel (0) target = $region21
    $region20: #{vae_forward.1} parent=1 // pred_region
      _
    $region21: #{vae_forward.1} parent=1 // pred_fallthru
      _
    %v21 = vld [vmem:[%s0] sm:$0xff]
    %v22 = vld [vmem:[%s1] sm:$0xff]
    %v23 = vld [vmem:[%s4] sm:$0xff]
    %v24 = vld [vmem:[%s2] sm:$0xff]
    %v25 = vld [vmem:[%s2 + $0x8] sm:$0xff]
    %v26 = vld [vmem:[%s2 + $0x10] sm:$0xff]
    %v27 = vld [vmem:[%s2 + $0x18] sm:$0xff]
    %v28 = vld [vmem:[%s2 + $0x20] sm:$0xff]
    %v29 = vld [vmem:[%s2 + $0x28] sm:$0xff]
    %v30 = vld [vmem:[%s2 + $0x30] sm:$0xff]
    %v31 = vld [vmem:[%s2 + $0x38] sm:$0xff]
    %v32 = vperm.slane %v23, 0
    %vm33 = vcmask 523264
    %v35 = vsel %vm33, %v21, 0
    %37 = vmatpush.msra.mxu0 0.0
    %38 = vmatpush.msra.mxu0 0.0
    %39 = vmatpush.msra.mxu0 0.0
    %40 = vmatpush.msra.mxu0 0.0
    %41 = vmatpush.msra.mxu0 0.0
    %42 = vmatpush.msra.mxu0 0.0
    %43 = vmatpush.msra.mxu0 0.0
    %44 = vmatpush.msra.mxu0 0.0
    %45 = vmatpush.msra.mxu0 %v31
    %46 = vmatpush.msra.mxu0 %v30
    %47 = vmatpush.msra.mxu0 %v29
    %48 = vmatpush.msra.mxu0 %v28
    %49 = vmatpush.msra.mxu0 %v27
    %50 = vmatpush.msra.mxu0 %v26
    %51 = vmatpush.msra.mxu0 %v25
    %52 = vmatpush.msra.mxu0 %v24
    %53 = vmatmul.f32.gmra.mxu0 %v35
    %v54 = vpop.f32.mrf.mxu0
    %v55 = vadd.f32 %v32, %v54
    %56 = vdwg.mxu0
    %v57 = vtanh.pop %v55
    %v58 = vld [vmem:[%s3] sm:$0xff]
    %v59 = vld [vmem:[%s3 + $0x28] sm:$0xff]
    %v60 = vld [vmem:[%s3 + $0x50] sm:$0xff]
    %v61 = vld [vmem:[%s3 + $0x78] sm:$0xff]
    %v62 = vld [vmem:[%s3 + $0xa0] sm:$0xff]
    %v63 = vld [vmem:[%s3 + $0xc8] sm:$0xff]
    %v64 = vld [vmem:[%s3 + $0xf0] sm:$0xff]
    %v65 = vld [vmem:[%s3 + $0x118] sm:$0xff]
    %v66 = vld [vmem:[%s3 + $0x140] sm:$0xff]
    %v67 = vld [vmem:[%s3 + $0x168] sm:$0xff]
    %v68 = vld [vmem:[%s3 + $0x190] sm:$0xff]
    %v69 = vld [vmem:[%s3 + $0x1b8] sm:$0xff]
    %v70 = vld [vmem:[%s3 + $0x1e0] sm:$0xff]
    %v71 = vld [vmem:[%s3 + $0x208] sm:$0xff]
    %v72 = vld [vmem:[%s3 + $0x230] sm:$0xff]
    %v73 = vld [vmem:[%s3 + $0x258] sm:$0xff]
    %v74 = vperm.slane %v23, 1
    %75 = vmatpush.msra.mxu0 %v73
    %76 = vmatpush.msra.mxu0 %v72
    %77 = vmatpush.msra.mxu0 %v71
    %78 = vmatpush.msra.mxu0 %v70
    %79 = vmatpush.msra.mxu0 %v69
    %80 = vmatpush.msra.mxu0 %v68
    %81 = vmatpush.msra.mxu0 %v67
    %82 = vmatpush.msra.mxu0 %v66
    %83 = vmatpush.msra.mxu0 %v65
    %84 = vmatpush.msra.mxu0 %v64
    %85 = vmatpush.msra.mxu0 %v63
    %86 = vmatpush.msra.mxu0 %v62
    %87 = vmatpush.msra.mxu0 %v61
    %88 = vmatpush.msra.mxu0 %v60
    %89 = vmatpush.msra.mxu0 %v59
    %90 = vmatpush.msra.mxu0 %v58
    %91 = vmatmul.f32.gmra.mxu0 %v57
    %v92 = vpop.f32.mrf.mxu0
    %v93 = vadd.f32 %v74, %v92
    %94 = vdwg.mxu0
    %v95 = vtanh.pop %v93
    %v96 = vld [vmem:[%s3 + $0x8] sm:$0xff]
    %v97 = vld [vmem:[%s3 + $0x30] sm:$0xff]
    %v98 = vld [vmem:[%s3 + $0x58] sm:$0xff]
    %v99 = vld [vmem:[%s3 + $0x80] sm:$0xff]
    %v100 = vld [vmem:[%s3 + $0xa8] sm:$0xff]
    %v101 = vld [vmem:[%s3 + $0xd0] sm:$0xff]
    %v102 = vld [vmem:[%s3 + $0xf8] sm:$0xff]
    %v103 = vld [vmem:[%s3 + $0x120] sm:$0xff]
    %v104 = vld [vmem:[%s3 + $0x148] sm:$0xff]
    %v105 = vld [vmem:[%s3 + $0x170] sm:$0xff]
    %v106 = vld [vmem:[%s3 + $0x198] sm:$0xff]
    %v107 = vld [vmem:[%s3 + $0x1c0] sm:$0xff]
    %v108 = vld [vmem:[%s3 + $0x1e8] sm:$0xff]
    %v109 = vld [vmem:[%s3 + $0x210] sm:$0xff]
    %v110 = vld [vmem:[%s3 + $0x238] sm:$0xff]
    %v111 = vld [vmem:[%s3 + $0x260] sm:$0xff]
    %v112 = vperm.slane %v23, 2
    %113 = vmatpush.msra.mxu0 %v111
    %114 = vmatpush.msra.mxu0 %v110
    %115 = vmatpush.msra.mxu0 %v109
    %116 = vmatpush.msra.mxu0 %v108
    %117 = vmatpush.msra.mxu0 %v107
    %118 = vmatpush.msra.mxu0 %v106
    %119 = vmatpush.msra.mxu0 %v105
    %120 = vmatpush.msra.mxu0 %v104
    %121 = vmatpush.msra.mxu0 %v103
    %122 = vmatpush.msra.mxu0 %v102
    %123 = vmatpush.msra.mxu0 %v101
    %124 = vmatpush.msra.mxu0 %v100
    %125 = vmatpush.msra.mxu0 %v99
    %126 = vmatpush.msra.mxu0 %v98
    %127 = vmatpush.msra.mxu0 %v97
    %128 = vmatpush.msra.mxu0 %v96
    %129 = vmatmul.f32.gmra.mxu0 %v95
    %v130 = vpop.f32.mrf.mxu0
    %v131 = vadd.f32 %v112, %v130
    %132 = vdwg.mxu0
    %v133 = vlaneseq
    %v134 = vand.u32 %v133, 127
    %vm135 = vcmp.lt.s32.totalorder %v134, 16
    %v136 = vmul.f32 %v131, 0.5
    %v137 = vmul.f32 %v136, 1.442695
    %v138 = vpow.pop %v137
    %v139 = vmul.f32 %v22, %v138
    %v140 = vsel %vm135, %v131, %v139
    %v141 = vld [vmem:[%s3 + $0x10] sm:$0xff]
    %v142 = vld [vmem:[%s3 + $0x38] sm:$0xff]
    %v143 = vld [vmem:[%s3 + $0x60] sm:$0xff]
    %v144 = vld [vmem:[%s3 + $0x88] sm:$0xff]
    %v145 = vld [vmem:[%s3 + $0xb0] sm:$0xff]
    %v146 = vld [vmem:[%s3 + $0xd8] sm:$0xff]
    %v147 = vld [vmem:[%s3 + $0x100] sm:$0xff]
    %v148 = vld [vmem:[%s3 + $0x128] sm:$0xff]
    %v149 = vld [vmem:[%s3 + $0x150] sm:$0xff]
    %v150 = vld [vmem:[%s3 + $0x178] sm:$0xff]
    %v151 = vld [vmem:[%s3 + $0x1a0] sm:$0xff]
    %v152 = vld [vmem:[%s3 + $0x1c8] sm:$0xff]
    %v153 = vld [vmem:[%s3 + $0x1f0] sm:$0xff]
    %v154 = vld [vmem:[%s3 + $0x218] sm:$0xff]
    %v155 = vld [vmem:[%s3 + $0x240] sm:$0xff]
    %v156 = vld [vmem:[%s3 + $0x268] sm:$0xff]
    %v157 = vperm.slane %v23, 3
    %158 = vmatpush.msra.mxu0 %v156
    %159 = vmatpush.msra.mxu0 %v155
    %160 = vmatpush.msra.mxu0 %v154
    %161 = vmatpush.msra.mxu0 %v153
    %162 = vmatpush.msra.mxu0 %v152
    %163 = vmatpush.msra.mxu0 %v151
    %164 = vmatpush.msra.mxu0 %v150
    %165 = vmatpush.msra.mxu0 %v149
    %166 = vmatpush.msra.mxu0 %v148
    %167 = vmatpush.msra.mxu0 %v147
    %168 = vmatpush.msra.mxu0 %v146
    %169 = vmatpush.msra.mxu0 %v145
    %170 = vmatpush.msra.mxu0 %v144
    %171 = vmatpush.msra.mxu0 %v143
    %172 = vmatpush.msra.mxu0 %v142
    %173 = vmatpush.msra.mxu0 %v141
    %174 = vmatmul.f32.gmra.mxu0 %v140
    %v175 = vpop.f32.mrf.mxu0
    %v176 = vadd.f32 %v157, %v175
    %177 = vdwg.mxu0
    %v178 = vtanh.pop %v176
    %v179 = vld [vmem:[%s3 + $0x18] sm:$0xff]
    %v180 = vld [vmem:[%s3 + $0x40] sm:$0xff]
    %v181 = vld [vmem:[%s3 + $0x68] sm:$0xff]
    %v182 = vld [vmem:[%s3 + $0x90] sm:$0xff]
    %v183 = vld [vmem:[%s3 + $0xb8] sm:$0xff]
    %v184 = vld [vmem:[%s3 + $0xe0] sm:$0xff]
    %v185 = vld [vmem:[%s3 + $0x108] sm:$0xff]
    %v186 = vld [vmem:[%s3 + $0x130] sm:$0xff]
    %v187 = vld [vmem:[%s3 + $0x158] sm:$0xff]
    %v188 = vld [vmem:[%s3 + $0x180] sm:$0xff]
    %v189 = vld [vmem:[%s3 + $0x1a8] sm:$0xff]
    %v190 = vld [vmem:[%s3 + $0x1d0] sm:$0xff]
    %v191 = vld [vmem:[%s3 + $0x1f8] sm:$0xff]
    %v192 = vld [vmem:[%s3 + $0x220] sm:$0xff]
    %v193 = vld [vmem:[%s3 + $0x248] sm:$0xff]
    %v194 = vld [vmem:[%s3 + $0x270] sm:$0xff]
    %v195 = vperm.slane %v23, 4
    %196 = vmatpush.msra.mxu0 %v194
    %197 = vmatpush.msra.mxu0 %v193
    %198 = vmatpush.msra.mxu0 %v192
    %199 = vmatpush.msra.mxu0 %v191
    %200 = vmatpush.msra.mxu0 %v190
    %201 = vmatpush.msra.mxu0 %v189
    %202 = vmatpush.msra.mxu0 %v188
    %203 = vmatpush.msra.mxu0 %v187
    %204 = vmatpush.msra.mxu0 %v186
    %205 = vmatpush.msra.mxu0 %v185
    %206 = vmatpush.msra.mxu0 %v184
    %207 = vmatpush.msra.mxu0 %v183
    %208 = vmatpush.msra.mxu0 %v182
    %209 = vmatpush.msra.mxu0 %v181
    %210 = vmatpush.msra.mxu0 %v180
    %211 = vmatpush.msra.mxu0 %v179
    %212 = vmatmul.f32.gmra.mxu0 %v178
    %v213 = vpop.f32.mrf.mxu0
    %v214 = vadd.f32 %v195, %v213
    %215 = vdwg.mxu0
    %v216 = vtanh.pop %v214
    %v217 = vld [vmem:[%s3 + $0x20] sm:$0xff]
    %v218 = vld [vmem:[%s3 + $0x48] sm:$0xff]
    %v219 = vld [vmem:[%s3 + $0x70] sm:$0xff]
    %v220 = vld [vmem:[%s3 + $0x98] sm:$0xff]
    %v221 = vld [vmem:[%s3 + $0xc0] sm:$0xff]
    %v222 = vld [vmem:[%s3 + $0xe8] sm:$0xff]
    %v223 = vld [vmem:[%s3 + $0x110] sm:$0xff]
    %v224 = vld [vmem:[%s3 + $0x138] sm:$0xff]
    %v225 = vld [vmem:[%s3 + $0x160] sm:$0xff]
    %v226 = vld [vmem:[%s3 + $0x188] sm:$0xff]
    %v227 = vld [vmem:[%s3 + $0x1b0] sm:$0xff]
    %v228 = vld [vmem:[%s3 + $0x1d8] sm:$0xff]
    %v229 = vld [vmem:[%s3 + $0x200] sm:$0xff]
    %v230 = vld [vmem:[%s3 + $0x228] sm:$0xff]
    %v231 = vld [vmem:[%s3 + $0x250] sm:$0xff]
    %v232 = vld [vmem:[%s3 + $0x278] sm:$0xff]
    %v233 = vperm.slane %v23, 5
    %234 = vmatpush.msra.mxu0 %v232
    %235 = vmatpush.msra.mxu0 %v231
    %236 = vmatpush.msra.mxu0 %v230
    %237 = vmatpush.msra.mxu0 %v229
    %238 = vmatpush.msra.mxu0 %v228
    %239 = vmatpush.msra.mxu0 %v227
    %240 = vmatpush.msra.mxu0 %v226
    %241 = vmatpush.msra.mxu0 %v225
    %242 = vmatpush.msra.mxu0 %v224
    %243 = vmatpush.msra.mxu0 %v223
    %244 = vmatpush.msra.mxu0 %v222
    %245 = vmatpush.msra.mxu0 %v221
    %246 = vmatpush.msra.mxu0 %v220
    %247 = vmatpush.msra.mxu0 %v219
    %248 = vmatpush.msra.mxu0 %v218
    %249 = vmatpush.msra.mxu0 %v217
    %250 = vmatmul.f32.gmra.mxu0 %v216
    %v251 = vpop.f32.mrf.mxu0
    %v252 = vadd.f32 %v233, %v251
    %253 = vdwg.mxu0
    %v254 = vtanh.pop %v252
    %255 = vst [vmem:[#allocation2] sm:$0xff] %v254
    // Predicated region
    $region22: #{vae_forward.1} parent=1 // pred_check
      _
    $region23: #{vae_forward.1} parent=1 // pred_check_branch
      %257 = sbr.rel (0) target = $region25
    $region24: #{vae_forward.1} parent=1 // pred_region
      %259 = vsyncadd [#allocation3], 0
      %s261 = sshll.u32 [#allocation2], 4
      %s262 = int_to_ptr.vmem [resolvable:$true] %s261
      %s263 = sshll.u32 %s5, 4
      %s264 = int_to_ptr.hbm [resolvable:$true] %s263
      %266 = dma.vmem_to_hbm [thread:$0]  %s262, 128, %s264, [#allocation3]
    $region25: #{vae_forward.1} parent=1 // pred_fallthru
      _
    // Predicated region
    $region26: #{vae_forward.1} parent=1 // pred_check
      _
    $region27: #{vae_forward.1} parent=1 // pred_check_branch
      %268 = sbr.rel (0) target = $region29
    $region28: #{vae_forward.1} parent=1 // pred_region
      %270 = dma.done [#allocation3], 128
    $region29: #{vae_forward.1} parent=1 // pred_fallthru
      _
    %271 = vsyncpa [#allocation3], 1

</llo_original>
